<compile_context>
chip_gen: v5e
topology: v5e:2x2
jax: 0.10.0
libtpu: 0.0.40
codegen_flags: <defaults>
</compile_context>

<pallas_src>
import jax
import jax.numpy as jnp
from jax.experimental import pallas as pl
from jax.experimental.pallas import tpu as pltpu


def _shuffle_copy_kernel(x_ref, o_ref):
    # x_ref, o_ref: (cpg, hw_tile) VMEM tiles — dense full-block copy,
    # zero VPU/XLU work; the transpose lives in the BlockSpec index_maps.
    o_ref[...] = x_ref[...]


def _pick_hw_tile(HW, cpg, dtype_bytes, block_budget_bytes):
    """Largest H*W tile (a 128-multiple dividing HW, or the full HW) whose
    double-buffered in+out footprint (4 * cpg * tile * bytes) fits the budget."""
    if HW % 128 != 0:
        # TODO(synk): pad/fold H*W to a 128 multiple to keep lane-dense stores;
        # a full-dim block is still correct, just uses masked partial stores.
        return HW
    max_tile = max(128, block_budget_bytes // (4 * cpg * dtype_bytes))
    n = HW // 128
    best_k = 1
    for k in range(1, n + 1):
        if n % k == 0 and 128 * k <= max_tile:
            best_k = k
    return 128 * best_k


def channel_shuffle(x, groups):
    """Pallas TPU equivalent of the PyTorch ChannelShuffle.forward (NCHW)."""
    B, C, H, W = x.shape
    assert C % groups == 0, "channels must be divisible by groups"
    cpg = C // groups
    HW = H * W
    dtype_bytes = jnp.dtype(x.dtype).itemsize

    # Per-generation VMEM capacity (v5e/v6e: 128 MiB, v7x: 64 MiB per core).
    try:
        vmem_cap = int(pltpu.get_tpu_info().vmem_capacity_bytes)
    except Exception:
        vmem_cap = 64 * 1024 * 1024  # conservative fallback (v7x-sized)

    # Let the double-buffered (input + output) working set use ~half of VMEM.
    block_budget = vmem_cap // 2
    hw_tile = _pick_hw_tile(HW, cpg, dtype_bytes, block_budget)
    n_hw = HW // hw_tile  # hw_tile always divides HW

    block_bytes = cpg * hw_tile * dtype_bytes
    footprint = 4 * block_bytes  # (in + out) x double buffering
    vmem_limit = int(
        min(vmem_cap - (8 << 20), max(footprint + (8 << 20), 32 << 20))
    )

    # Input: group axis explicit.  Output: shuffled channel layout flattened to
    # (cpg, groups*HW) so both blocks' trailing dims are (cpg, hw_tile).
    x4 = x.reshape(B, groups, cpg, HW)

    out3 = pl.pallas_call(
        _shuffle_copy_kernel,
        out_shape=jax.ShapeDtypeStruct((B, cpg, groups * HW), x.dtype),
        grid=(B, groups, n_hw),
        in_specs=[
            pl.BlockSpec(
                (pl.Squeezed(), pl.Squeezed(), cpg, hw_tile),
                lambda b, g, t: (b, g, 0, t),
            ),
        ],
        out_specs=pl.BlockSpec(
            (pl.Squeezed(), cpg, hw_tile),
            lambda b, g, t: (b, 0, g * n_hw + t),
        ),
        compiler_params=pltpu.CompilerParams(
            dimension_semantics=("parallel", "parallel", "parallel"),
            vmem_limit_bytes=vmem_limit,
        ),
    )(x4)

    # Flatten (cpg, groups, HW) back into channels -> shuffled NCHW.
    return out3.reshape(B, C, H, W)


def channel_shuffle_ref(x, groups):
    """Pure-JAX reference matching the PyTorch forward exactly."""
    B, C, H, W = x.shape
    cpg = C // groups
    x = x.reshape(B, groups, cpg, H, W)
    x = jnp.transpose(x, (0, 2, 1, 3, 4))
    return x.reshape(B, C, H, W)


if __name__ == "__main__":
    key = jax.random.PRNGKey(0)

    # Case 1: small NCHW tensor consistent with the module.
    B, C, H, W = 2, 8, 16, 16
    groups = 4
    x = jax.random.normal(key, (B, C, H, W), dtype=jnp.float32)
    out = jax.block_until_ready(channel_shuffle(x, groups))
    ref = channel_shuffle_ref(x, groups)
    assert out.shape == (B, C, H, W)
    assert jnp.array_equal(out, ref), "Pallas channel shuffle mismatch (case 1)"

    # Case 2: different groups / channels-per-group to exercise the index maps.
    B2, C2, H2, W2, g2 = 1, 12, 8, 16, 3
    x2 = jax.random.normal(jax.random.PRNGKey(1), (B2, C2, H2, W2), jnp.float32)
    out2 = jax.block_until_ready(channel_shuffle(x2, g2))
    assert jnp.array_equal(out2, channel_shuffle_ref(x2, g2)), (
        "Pallas channel shuffle mismatch (case 2)"
    )

    print("KERNEL_OK")
</pallas_src>

<mosaic_0001>
module attributes {stable_mosaic.version = 11 : i64} {
  func.func @_shuffle_copy_kernel(%arg0: i32, %arg1: i32, %arg2: i32, %arg3: memref<1x1x2x256xf32, #tpu.memory_space<vmem>>, %arg4: memref<1x2x256xf32, #tpu.memory_space<vmem>>) attributes {dimension_semantics = [#tpu.dimension_semantics<parallel>, #tpu.dimension_semantics<parallel>, #tpu.dimension_semantics<parallel>], iteration_bounds = array<i64: 2, 4, 1>, scalar_prefetch = 0 : i64, scratch_operands = 0 : i64, tpu.core_type = #tpu.core_type<tc>, window_params = [{transform_indices = @transform_0, window_bounds = array<i64: 1, 1, 2, 256>}, {transform_indices = @transform_1, window_bounds = array<i64: 1, 2, 256>}]} {
    %c0 = arith.constant 0 : index
    %c0_0 = arith.constant 0 : index
    %c0_1 = arith.constant 0 : index
    %c0_2 = arith.constant 0 : index
    %0 = vector.load %arg3[%c0, %c0_0, %c0_1, %c0_2] : memref<1x1x2x256xf32, #tpu.memory_space<vmem>>, vector<1x1x2x256xf32>
    %1 = vector.shape_cast %0 : vector<1x1x2x256xf32> to vector<2x256xf32>
    %c0_3 = arith.constant 0 : index
    %c0_4 = arith.constant 0 : index
    %c0_5 = arith.constant 0 : index
    %2 = vector.load %arg4[%c0_3, %c0_4, %c0_5] : memref<1x2x256xf32, #tpu.memory_space<vmem>>, vector<1x2x256xf32>
    %3 = vector.shape_cast %2 : vector<1x2x256xf32> to vector<2x256xf32>
    %4 = vector.shape_cast %1 : vector<2x256xf32> to vector<1x2x256xf32>
    tpu.vector_store %arg4[%c0_3, %c0_4, %c0_5], %4 {strides = array<i32>} : memref<1x2x256xf32, #tpu.memory_space<vmem>>, vector<1x2x256xf32>,
    return
  }
  func.func @transform_0(%arg0: i32, %arg1: i32, %arg2: i32) -> (i32, i32, i32, i32) {
    %c0_i32 = arith.constant 0 : i32
    %c0_i32_0 = arith.constant 0 : i32
    return %arg0, %arg1, %c0_i32, %arg2 : i32, i32, i32, i32
  }
  func.func @transform_1(%arg0: i32, %arg1: i32, %arg2: i32) -> (i32, i32, i32) {
    %c1_i32 = arith.constant 1 : i32
    %0 = arith.muli %arg1, %c1_i32 : i32
    %1 = arith.addi %0, %arg2 : i32
    %c0_i32 = arith.constant 0 : i32
    %c0_i32_0 = arith.constant 0 : i32
    return %arg0, %c0_i32, %1 : i32, i32, i32
  }
}

</mosaic_0001>

<llo_original>
// kernel: tpu_custom_call.1
$region0: #{tpu_custom_call.1}
  #allocation0 [shape = 'u32[]', space=smem, size = 0x4, offset = 0x4, fixed_abs, tag = 'smem constant byte address 0x4 - core index']
  #allocation1 [shape = 'u32[72,128]{1,0:T(1,128)}', space=vmem, size = 0x9000, scoped, tag = 'internal scratch']
  %s0 = inlined_call_operand.hbm [shape: f32[2,4,2,256], index: 0, kind: input, shape index: {}]
  %s1 = inlined_call_operand.hbm [shape: f32[2,2,1024], index: 1, kind: output, shape index: {}]
  %s2 = sld [smem:[#allocation0]]
  $region41: #{tpu_custom_call.1} parent=0
    _
  %s4 = ssub.s32 1, %s2
  %s5 = scalar_select 0, %s4, %s2
  $region1: #{tpu_custom_call.1} parent=0
    #allocation2 [shape = 'u8[4096]{0}', space=vmem, size = 0x1000, scoped, tag = 'input window, operand 0']
    #allocation3 [shape = 's32[2]{0}', space=sflag, size = 0x8, scoped, tag = 'scoped memory for tpu_custom_call.1']
    #allocation4 [shape = 's32[2]{0}', space=sflag, size = 0x8, scoped, tag = 'scoped memory for tpu_custom_call.1']
    #allocation5 [shape = 'u8[4096]{0}', space=vmem, size = 0x1000, scoped, tag = 'output window, operand 0']
    %6 = vsyncpa [#allocation3], 0
    %s7 = scalar_lea.sflag [#allocation3], 1
    %8 = vsyncpa %s7, 0
    %9 = vsyncpa [#allocation4], 0
    %s10 = scalar_lea.sflag [#allocation4], 1
    %11 = vsyncpa %s10, 0
    loop: start=0, step=1, limit=10
    $region2: #{tpu_custom_call.1} parent=1 // loop_pre_header
      _
    $region3: #{tpu_custom_call.1} parent=1 // loop_header
      %s13 = sphi 0, %s17
      %p14 = scmp.ge.s32.totalorder %s13, 10
      %s20 = sphi 0, %s39
      %s21 = sphi 0, %s35
      %s22 = sphi 0, %s31
      %s23 = sphi 0, %s20
      %s24 = sphi 0, %s21
      %s25 = sphi 0, %s22
      %s26 = sphi 0, %s23
      %s27 = sphi 0, %s24
      %s28 = sphi 0, %s25
      %s46 = sphi 0, %s48
      %s49 = sphi 0, %s46
      %s50 = sphi 0, %s49
      %s66 = sphi 0, %s50
      %s76 = sphi 0, %s78
      %s79 = sphi 0, %s76
      %s80 = sphi 0, %s79
      %s96 = sphi 0, %s80
    $region4: #{tpu_custom_call.1} parent=1 // loop_header_branch
      %16 = sbr.rel (%p14) target = $region8
    $region5: #{tpu_custom_call.1} parent=1 // loop_body
      %s18 = ssub.s32 %s13, 1
      %s19 = ssub.s32 %s13, 2
      %s29 = sadd.s32 1, %s22
      %p30 = scmp.ge.s32.totalorder %s29, 1
      %s31 = scalar_select %p30, 0, %s29
      %s32 = sadd.s32 1, %s21
      %s33 = scalar_select %p30, %s32, %s21
      %p34 = scmp.ge.s32.totalorder %s33, 4
      %s35 = scalar_select %p34, 0, %s33
      %s36 = sadd.s32 1, %s20
      %s37 = scalar_select %p34, %s36, %s20
      %p38 = scmp.ge.s32.totalorder %s37, 2
      %s39 = scalar_select %p38, 0, %s37
      %s40 = ssub.s32 %s20, %s39
      %s41 = ssub.s32 %s21, %s35
      %s42 = sor.u32 %s40, %s41
      %s43 = ssub.s32 %s22, %s31
      %s44 = sor.u32 %s42, %s43
      %p45 = scmp.eq.s32.totalorder %s44, 0
      %s47 = sadd.s32 %s46, 1
      %s48 = scalar_select %p45, %s46, %s47
      %p51 = pneg %p45
      %p52 = scmp.eq.s32.totalorder %s13, 7
      %p53 = por %p51, %p52
      %p54 = scmp.ne.s32.totalorder %s46, %s49
      %p55 = scmp.eq.s32.totalorder %s13, 0
      %p56 = por %p54, %p55
      %p57 = scmp.ne.s32.totalorder %s46, %s49
      %p58 = scmp.eq.s32.totalorder %s18, 7
      %p59 = por %p57, %p58
      %p60 = scmp.ne.s32.totalorder %s49, %s50
      %p61 = scmp.eq.s32.totalorder %s18, 0
      %p62 = por %p60, %p61
      %p63 = scmp.ne.s32.totalorder %s49, %s50
      %p64 = scmp.eq.s32.totalorder %s19, 7
      %p65 = por %p63, %p64
      %p67 = scmp.ne.s32.totalorder %s50, %s66
      %p68 = scmp.eq.s32.totalorder %s19, 0
      %p69 = por %p67, %p68
      %s70 = sadd.s32 %s21, %s22
      %s71 = sadd.s32 %s35, %s31
      %s72 = ssub.s32 %s20, %s39
      %s73 = ssub.s32 %s70, %s71
      %s74 = sor.u32 %s72, %s73
      %p75 = scmp.eq.s32.totalorder %s74, 0
      %s77 = sadd.s32 %s76, 1
      %s78 = scalar_select %p75, %s76, %s77
      %p81 = pneg %p75
      %p82 = scmp.eq.s32.totalorder %s13, 7
      %p83 = por %p81, %p82
      %p84 = scmp.ne.s32.totalorder %s76, %s79
      %p85 = scmp.eq.s32.totalorder %s13, 0
      %p86 = por %p84, %p85
      %p87 = scmp.ne.s32.totalorder %s76, %s79
      %p88 = scmp.eq.s32.totalorder %s18, 7
      %p89 = por %p87, %p88
      %p90 = scmp.ne.s32.totalorder %s79, %s80
      %p91 = scmp.eq.s32.totalorder %s18, 0
      %p92 = por %p90, %p91
      %p93 = scmp.ne.s32.totalorder %s79, %s80
      %p94 = scmp.eq.s32.totalorder %s19, 7
      %p95 = por %p93, %p94
      %p97 = scmp.ne.s32.totalorder %s80, %s96
      %p98 = scmp.eq.s32.totalorder %s19, 0
      %p99 = por %p97, %p98
      %p100 = scmp.le.s32.totalorder 1, %s13
      %p101 = scmp.lt.s32.totalorder %s13, 9
      %p102 = pnand %p100, %p101
      %p103 = pneg %p102
      // Predicated region
      $region9: #{tpu_custom_call.1} parent=5 // pred_check
        _
      $region10: #{tpu_custom_call.1} parent=5 // pred_check_branch
        %105 = sbr.rel (%p102) target = $region12
      $region11: #{tpu_custom_call.1} parent=5 // pred_region
        %s106 = ssub.s32 %s13, 1
      $region12: #{tpu_custom_call.1} parent=5 // pred_fallthru
        _
      %p107 = scmp.lt.s32.totalorder %s13, 8
      // Predicated region
      $region13: #{tpu_custom_call.1} parent=5 // pred_check
        %p108 = pneg %p107
      $region14: #{tpu_custom_call.1} parent=5 // pred_check_branch
        %110 = sbr.rel (%p108) target = $region16
      $region15: #{tpu_custom_call.1} parent=5 // pred_region
        // Predicated region
        $region17: #{tpu_custom_call.1} parent=15 // pred_check
          %p111 = pneg %p56
        $region18: #{tpu_custom_call.1} parent=15 // pred_check_branch
          %113 = sbr.rel (%p111) target = $region20
        $region19: #{tpu_custom_call.1} parent=15 // pred_region
          %s114 = sand.u32 %s46, 1
          %s115 = scalar_lea.sflag [#allocation3], %s114
          %s116 = sand.u32 %s46, 1
          %s117 = smul.addr %s116, 4
          %s118 = scalar_lea.vmem [#allocation2], %s117
          %s119 = smul.u32 2, %s22
          %121 = vsyncadd %s115, 0
          %s122 = smul.addr %s21, 2
          %s123 = sadd.s32 %s119, %s122
          %s124 = smul.addr %s20, 8
          %s125 = sadd.s32 %s123, %s124
          %s126 = smul.addr %s125, 2
          %s127 = scalar_lea.hbm %s0, %s126
          %s129 = sshll.u32 %s127, 4
          %s130 = int_to_ptr.hbm [resolvable:$true] %s129
          %s131 = sshll.u32 %s118, 4
          %s132 = int_to_ptr.vmem [resolvable:$true] %s131
          %134 = dma.hbm_to_vmem [thread:$0]  %s130, 64, %s132, %s115
        $region20: #{tpu_custom_call.1} parent=15 // pred_fallthru
          _
      $region16: #{tpu_custom_call.1} parent=5 // pred_fallthru
        _
      %p135 = scmp.le.s32.totalorder 1, %s13
      %p136 = scmp.lt.s32.totalorder %s13, 9
      %p137 = pnand %p135, %p136
      %p138 = pneg %p137
      // Predicated region
      $region21: #{tpu_custom_call.1} parent=5 // pred_check
        _
      $region22: #{tpu_custom_call.1} parent=5 // pred_check_branch
        %140 = sbr.rel (%p137) target = $region24
      $region23: #{tpu_custom_call.1} parent=5 // pred_region
        %s141 = ssub.s32 %s13, 1
        %s142 = sand.u32 %s49, 1
        %s143 = scalar_lea.sflag [#allocation3], %s142
        %s144 = sand.u32 %s49, 1
        %s145 = smul.addr %s144, 4
        %s146 = scalar_lea.vmem [#allocation2], %s145
        // Predicated region
        $region25: #{tpu_custom_call.1} parent=23 // pred_check
          %p147 = pneg %p62
        $region26: #{tpu_custom_call.1} parent=23 // pred_check_branch
          %149 = sbr.rel (%p147) target = $region28
        $region27: #{tpu_custom_call.1} parent=23 // pred_region
          %151 = dma.done %s143, 64
        $region28: #{tpu_custom_call.1} parent=23 // pred_fallthru
          _
        %s152 = sand.u32 %s49, 1
        %s153 = scalar_lea.sflag [#allocation3], %s152
        %s154 = sand.u32 %s49, 1
        %s155 = smul.addr %s154, 4
        %s156 = scalar_lea.vmem [#allocation2], %s155
        %p157 = pneg %p62
        %p158 = pneg %p59
        %p159 = pneg %p92
        %p160 = pneg %p89
        %s161 = sand.u32 %s79, 1
        %s162 = scalar_lea.sflag [#allocation4], %s161
        %s163 = sand.u32 %s79, 1
        %s164 = smul.addr %s163, 4
        %s165 = scalar_lea.vmem [#allocation5], %s164
        %s166 = smul.u32 2, %s25
        %s167 = sadd.s32 %s24, %s25
        %s168 = smul.u32 2, %s167
        %v169 = vld [vmem:[%s146] sm:$0xf]
        %170 = vst [vmem:[%s165] sm:$0xf] %v169
        %s171 = sand.u32 %s79, 1
        %s172 = scalar_lea.sflag [#allocation4], %s171
        %s173 = sand.u32 %s79, 1
        %s174 = smul.addr %s173, 4
        %s175 = scalar_lea.vmem [#allocation5], %s174
        // Predicated region
        $region29: #{tpu_custom_call.1} parent=23 // pred_check
          %p176 = pneg %p89
        $region30: #{tpu_custom_call.1} parent=23 // pred_check_branch
          %178 = sbr.rel (%p176) target = $region32
        $region31: #{tpu_custom_call.1} parent=23 // pred_region
          %s179 = sadd.s32 %s24, %s25
          %s180 = smul.u32 2, %s179
          %182 = vsyncadd %s172, 0
          %s183 = smul.addr %s23, 8
          %s184 = sadd.s32 %s180, %s183
          %s185 = smul.addr %s184, 2
          %s186 = scalar_lea.hbm %s1, %s185
          %s188 = sshll.u32 %s175, 4
          %s189 = int_to_ptr.vmem [resolvable:$true] %s188
          %s190 = sshll.u32 %s186, 4
          %s191 = int_to_ptr.hbm [resolvable:$true] %s190
          %193 = dma.vmem_to_hbm [thread:$0]  %s189, 64, %s191, %s172
        $region32: #{tpu_custom_call.1} parent=23 // pred_fallthru
          _
      $region24: #{tpu_custom_call.1} parent=5 // pred_fallthru
        _
      %p194 = scmp.le.s32.totalorder 2, %s13
      // Predicated region
      $region33: #{tpu_custom_call.1} parent=5 // pred_check
        %p195 = pneg %p194
      $region34: #{tpu_custom_call.1} parent=5 // pred_check_branch
        %197 = sbr.rel (%p195) target = $region36
      $region35: #{tpu_custom_call.1} parent=5 // pred_region
        %s198 = ssub.s32 %s13, 2
        // Predicated region
        $region37: #{tpu_custom_call.1} parent=35 // pred_check
          %p199 = pneg %p95
        $region38: #{tpu_custom_call.1} parent=35 // pred_check_branch
          %201 = sbr.rel (%p199) target = $region40
        $region39: #{tpu_custom_call.1} parent=35 // pred_region
          %s202 = sand.u32 %s80, 1
          %s203 = scalar_lea.sflag [#allocation4], %s202
          %s204 = sand.u32 %s80, 1
          %s205 = smul.addr %s204, 4
          %s206 = scalar_lea.vmem [#allocation5], %s205
          %208 = dma.done %s203, 64
        $region40: #{tpu_custom_call.1} parent=35 // pred_fallthru
          _
      $region36: #{tpu_custom_call.1} parent=5 // pred_fallthru
        _
    $region6: #{tpu_custom_call.1} parent=1 // loop_footer
      %s17 = sadd.s32 1, %s13
    $region7: #{tpu_custom_call.1} parent=1 // loop_footer_branch
      %12 = sbr.rel target = $region3
    $region8: #{tpu_custom_call.1} parent=1 // loop_exit
      _
    %209 = vsyncpa [#allocation3], 1
    %s210 = scalar_lea.sflag [#allocation3], 1
    %211 = vsyncpa %s210, 1
    %212 = vsyncpa [#allocation4], 1
    %s213 = scalar_lea.sflag [#allocation4], 1
    %214 = vsyncpa %s213, 1

</llo_original>
